<compile_context>
chip_gen: v7x
topology: tpu7x:2x2x1
jax: 0.10.0
libtpu: 0.0.40
codegen_flags: <defaults>
</compile_context>

<pallas_src>
import functools

import jax
import jax.numpy as jnp
from jax.experimental import pallas as pl
from jax.experimental.pallas import tpu as pltpu


def _club_kernel(x_ref, y_ref, yp_ref, w1_ref, b1_ref, w2_ref, b2_ref, out_ref,
                 *, y_dim, scale):
    i = pl.program_id(0)

    @pl.when(i == 0)
    def _init():
        out_ref[0, 0] = jnp.float32(0.0)

    x = x_ref[...].astype(jnp.float32)
    y = y_ref[...].astype(jnp.float32)
    yp = yp_ref[...].astype(jnp.float32)

    # Fused layer 1: [h_mu | h_lv] in one matmul.
    h = jnp.dot(x, w1_ref[...], preferred_element_type=jnp.float32) + b1_ref[...]
    h = jnp.maximum(h, 0.0)

    # Fused (block-diagonal) layer 2: [mu | logvar_raw] in one matmul.
    z = jnp.dot(h, w2_ref[...], preferred_element_type=jnp.float32) + b2_ref[...]
    mu = z[:, :y_dim]
    logvar = jnp.tanh(z[:, y_dim:])
    inv_var = jnp.exp(-logvar)

    # positive - negative, elementwise; the -logvar/2 terms cancel exactly and
    # the 1/2 factors are folded into `scale`.
    term = inv_var * (y - yp) * (2.0 * mu - y - yp)
    out_ref[0, 0] += jnp.sum(term)

    @pl.when(i == pl.num_programs(0) - 1)
    def _finalize():
        # scale = 0.25 / N  ==  (inner /2) * (final /2) * (1/N of the mean)
        out_ref[0, 0] = jnp.maximum(out_ref[0, 0] * scale, 0.0)


def _pick_tile(n):
    for t in (512, 256, 128, 64, 32, 16, 8):
        if n % t == 0:
            return t
    return n  # fall back: whole batch in one tile


def fuse_params(raw_params):
    """Pack the 4 Linear layers into 2 fused weight matrices (done once)."""
    (w1m, b1m, w2m, b2m, w1v, b1v, w2v, b2v) = raw_params
    h2 = w1m.shape[1]
    y_dim = w2m.shape[1]
    w1 = jnp.concatenate([w1m, w1v], axis=1)                     # (x_dim, 2*h2)
    b1 = jnp.concatenate([b1m, b1v], axis=1)                     # (1, 2*h2)
    zeros = jnp.zeros((h2, y_dim), w2m.dtype)
    w2 = jnp.concatenate(
        [jnp.concatenate([w2m, zeros], axis=1),
         jnp.concatenate([zeros, w2v], axis=1)], axis=0)         # (2*h2, 2*y_dim)
    b2 = jnp.concatenate([b2m, b2v], axis=1)                     # (1, 2*y_dim)
    return w1, b1, w2, b2


def club_sample_forward(x, y, y_perm, fused_params, *, tile_n=None):
    w1, b1, w2, b2 = fused_params
    n, x_dim = x.shape
    y_dim = y.shape[1]
    h2x2 = w1.shape[1]

    tn = tile_n if tile_n is not None else _pick_tile(n)
    assert n % tn == 0, "batch must be divisible by the batch tile"
    grid = (n // tn,)
    scale = 0.25 / n

    kernel = functools.partial(_club_kernel, y_dim=y_dim, scale=scale)

    grid_spec = pltpu.PrefetchScalarGridSpec(
        num_scalar_prefetch=0,
        grid=grid,
        in_specs=[
            # activations: streamed batch tiles
            pl.BlockSpec((tn, x_dim), lambda i: (i, 0)),
            pl.BlockSpec((tn, y_dim), lambda i: (i, 0)),
            pl.BlockSpec((tn, y_dim), lambda i: (i, 0)),
            # fused weights / biases: VMEM-resident across all batch tiles
            pl.BlockSpec((x_dim, h2x2), lambda i: (0, 0)),
            pl.BlockSpec((1, h2x2), lambda i: (0, 0)),
            pl.BlockSpec((h2x2, 2 * y_dim), lambda i: (0, 0)),
            pl.BlockSpec((1, 2 * y_dim), lambda i: (0, 0)),
        ],
        out_specs=pl.BlockSpec(memory_space=pltpu.MemorySpace.SMEM),
    )

    out = pl.pallas_call(
        kernel,
        out_shape=jax.ShapeDtypeStruct((1, 1), jnp.float32),
        grid_spec=grid_spec,
        compiler_params=pltpu.CompilerParams(
            # batch axis is an accumulation axis (partial sums into SMEM out)
            # TODO(synk): on v7x, emit per-tile partial sums with a "parallel"
            # axis (finish the mean in JAX) to use both TensorCores.
            dimension_semantics=("arbitrary",),
            vmem_limit_bytes=32 * 1024 * 1024,
        ),
    )(x, y, y_perm, w1, b1, w2, b2)
    return out[0, 0]


def _init_linear(key, fan_in, fan_out):
    # mimic torch.nn.Linear default init: U(-1/sqrt(fan_in), 1/sqrt(fan_in))
    kw, kb = jax.random.split(key)
    bound = 1.0 / jnp.sqrt(jnp.float32(fan_in))
    w = jax.random.uniform(kw, (fan_in, fan_out), jnp.float32, -bound, bound)
    b = jax.random.uniform(kb, (1, fan_out), jnp.float32, -bound, bound)
    return w, b


def _reference(x, y, y_perm, raw_params):
    """Direct JAX transcription of the PyTorch CLUBSample.forward spec."""
    (w1m, b1m, w2m, b2m, w1v, b1v, w2v, b2v) = raw_params
    hp = jax.lax.Precision.HIGHEST
    h_mu = jnp.maximum(jnp.dot(x, w1m, precision=hp) + b1m, 0.0)
    mu = jnp.dot(h_mu, w2m, precision=hp) + b2m
    h_lv = jnp.maximum(jnp.dot(x, w1v, precision=hp) + b1v, 0.0)
    logvar = jnp.tanh(jnp.dot(h_lv, w2v, precision=hp) + b2v)
    pos = (-(mu - y) ** 2 / jnp.exp(logvar) / 2.0 - logvar / 2.0).sum(axis=1)
    neg = (-(mu - y_perm) ** 2 / jnp.exp(logvar) / 2.0 - logvar / 2.0).sum(axis=1)
    bound = jnp.mean(pos - neg)
    return jnp.maximum(bound / 2.0, 0.0)


if __name__ == "__main__":
    # small shapes consistent with the module
    N, X_DIM, Y_DIM, HIDDEN = 16, 32, 16, 32
    H2 = HIDDEN // 2

    key = jax.random.PRNGKey(0)
    kx, ky, kperm, k1, k2, k3, k4 = jax.random.split(key, 7)

    x = jax.random.normal(kx, (N, X_DIM), jnp.float32)
    y = jax.random.normal(ky, (N, Y_DIM), jnp.float32)

    # torch.randperm equivalent; the gather stays as plain-JAX glue.
    # TODO(synk): for large N, move the gather in-kernel (scalar-prefetched perm
    # + pl.Element row-gather BlockSpec) to avoid materializing y_perm in HBM.
    perm = jax.random.permutation(kperm, N)
    y_perm = y[perm]

    w1m, b1m = _init_linear(k1, X_DIM, H2)
    w2m, b2m = _init_linear(k2, H2, Y_DIM)
    w1v, b1v = _init_linear(k3, X_DIM, H2)
    w2v, b2v = _init_linear(k4, H2, Y_DIM)
    raw_params = (w1m, b1m, w2m, b2m, w1v, b1v, w2v, b2v)
    fused = fuse_params(raw_params)

    # tile_n=8 -> grid of 2 batch tiles: exercises the resident weights,
    # streamed activations and the SMEM partial-sum accumulation path.
    out = club_sample_forward(x, y, y_perm, fused, tile_n=8)
    out = jax.block_until_ready(out)

    ref = _reference(x, y, y_perm, raw_params)
    assert jnp.allclose(out, ref, atol=1e-4, rtol=1e-4), (out, ref)

    print("KERNEL_OK")
</pallas_src>

<mosaic_0001>
module attributes {stable_mosaic.version = 11 : i64} {
  func.func @_club_kernel(%arg0: i32, %arg1: memref<8x32xf32, #tpu.memory_space<vmem>>, %arg2: memref<8x16xf32, #tpu.memory_space<vmem>>, %arg3: memref<8x16xf32, #tpu.memory_space<vmem>>, %arg4: memref<32x32xf32, #tpu.memory_space<vmem>>, %arg5: memref<1x32xf32, #tpu.memory_space<vmem>>, %arg6: memref<32x32xf32, #tpu.memory_space<vmem>>, %arg7: memref<1x32xf32, #tpu.memory_space<vmem>>, %arg8: memref<1x1xf32, #tpu.memory_space<smem>>) attributes {dimension_semantics = [#tpu.dimension_semantics<arbitrary>], iteration_bounds = array<i64: 2>, scalar_prefetch = 0 : i64, scratch_operands = 0 : i64, tpu.core_type = #tpu.core_type<tc>, window_params = [{transform_indices = @transform_0, window_bounds = array<i64: 8, 32>}, {transform_indices = @transform_1, window_bounds = array<i64: 8, 16>}, {transform_indices = @transform_2, window_bounds = array<i64: 8, 16>}, {pipeline_mode = #tpu.pipeline_mode<synchronous>, transform_indices = @transform_3, window_bounds = array<i64: 32, 32>}, {pipeline_mode = #tpu.pipeline_mode<synchronous>, transform_indices = @transform_4, window_bounds = array<i64: 1, 32>}, {pipeline_mode = #tpu.pipeline_mode<synchronous>, transform_indices = @transform_5, window_bounds = array<i64: 32, 32>}, {pipeline_mode = #tpu.pipeline_mode<synchronous>, transform_indices = @transform_6, window_bounds = array<i64: 1, 32>}, {transform_indices = @transform_7, window_bounds = array<i64: 1, 1>}]} {
    %c0_i32 = arith.constant 0 : i32
    %0 = arith.cmpi eq, %arg0, %c0_i32 : i32
    %1 = arith.extui %0 : i1 to i32
    %c0_i32_0 = arith.constant 0 : i32
    %2 = arith.cmpi ne, %1, %c0_i32_0 : i32
    scf.if %2 {
      %cst_24 = arith.constant 0.000000e+00 : f32
      %c0_25 = arith.constant 0 : index
      %c0_26 = arith.constant 0 : index
      %41 = memref.load %arg8[%c0_25, %c0_26] : memref<1x1xf32, #tpu.memory_space<smem>>
      memref.store %cst_24, %arg8[%c0_25, %c0_26] : memref<1x1xf32, #tpu.memory_space<smem>>
    } else {
    }
    %c0 = arith.constant 0 : index
    %c0_1 = arith.constant 0 : index
    %3 = vector.load %arg1[%c0, %c0_1] : memref<8x32xf32, #tpu.memory_space<vmem>>, vector<8x32xf32>
    %c0_2 = arith.constant 0 : index
    %c0_3 = arith.constant 0 : index
    %4 = vector.load %arg2[%c0_2, %c0_3] : memref<8x16xf32, #tpu.memory_space<vmem>>, vector<8x16xf32>
    %c0_4 = arith.constant 0 : index
    %c0_5 = arith.constant 0 : index
    %5 = vector.load %arg3[%c0_4, %c0_5] : memref<8x16xf32, #tpu.memory_space<vmem>>, vector<8x16xf32>
    %c0_6 = arith.constant 0 : index
    %c0_7 = arith.constant 0 : index
    %6 = vector.load %arg4[%c0_6, %c0_7] : memref<32x32xf32, #tpu.memory_space<vmem>>, vector<32x32xf32>
    %cst = arith.constant dense<0.000000e+00> : vector<8x32xf32>
    %7 = tpu.matmul %3, %6, %cst {dimension_numbers = #tpu.dot_dimension_numbers<[1], [0], [0], [1], [0, 0, 1, 1], [], []>} : vector<8x32xf32>, vector<32x32xf32>, vector<8x32xf32> -> vector<8x32xf32>
    %c0_8 = arith.constant 0 : index
    %c0_9 = arith.constant 0 : index
    %8 = vector.load %arg5[%c0_8, %c0_9] : memref<1x32xf32, #tpu.memory_space<vmem>>, vector<1x32xf32>
    %9 = vector.broadcast %8 : vector<1x32xf32> to vector<8x32xf32>
    %10 = arith.addf %7, %9 : vector<8x32xf32>
    %cst_10 = arith.constant 0.000000e+00 : f32
    %11 = vector.broadcast %cst_10 : f32 to vector<8x32xf32>
    %12 = arith.maximumf %10, %11 : vector<8x32xf32>
    %c0_11 = arith.constant 0 : index
    %c0_12 = arith.constant 0 : index
    %13 = vector.load %arg6[%c0_11, %c0_12] : memref<32x32xf32, #tpu.memory_space<vmem>>, vector<32x32xf32>
    %cst_13 = arith.constant dense<0.000000e+00> : vector<8x32xf32>
    %14 = tpu.matmul %12, %13, %cst_13 {dimension_numbers = #tpu.dot_dimension_numbers<[1], [0], [0], [1], [0, 0, 1, 1], [], []>} : vector<8x32xf32>, vector<32x32xf32>, vector<8x32xf32> -> vector<8x32xf32>
    %c0_14 = arith.constant 0 : index
    %c0_15 = arith.constant 0 : index
    %15 = vector.load %arg7[%c0_14, %c0_15] : memref<1x32xf32, #tpu.memory_space<vmem>>, vector<1x32xf32>
    %16 = vector.broadcast %15 : vector<1x32xf32> to vector<8x32xf32>
    %17 = arith.addf %14, %16 : vector<8x32xf32>
    %18 = vector.extract_strided_slice %17 {offsets = [0, 0], sizes = [8, 16], strides = [1, 1]} : vector<8x32xf32> to vector<8x16xf32>
    %19 = vector.extract_strided_slice %17 {offsets = [0, 16], sizes = [8, 16], strides = [1, 1]} : vector<8x32xf32> to vector<8x16xf32>
    %20 = math.tanh %19 : vector<8x16xf32>
    %cst_16 = arith.constant 0.000000e+00 : f32
    %21 = vector.broadcast %cst_16 : f32 to vector<8x16xf32>
    %22 = arith.subf %21, %20 : vector<8x16xf32>
    %23 = math.exp %22 : vector<8x16xf32>
    %24 = arith.subf %4, %5 : vector<8x16xf32>
    %25 = arith.mulf %23, %24 : vector<8x16xf32>
    %cst_17 = arith.constant 2.000000e+00 : f32
    %26 = vector.broadcast %cst_17 : f32 to vector<8x16xf32>
    %27 = arith.mulf %26, %18 : vector<8x16xf32>
    %28 = arith.subf %27, %4 : vector<8x16xf32>
    %29 = arith.subf %28, %5 : vector<8x16xf32>
    %30 = arith.mulf %25, %29 : vector<8x16xf32>
    %c0_18 = arith.constant 0 : index
    %c0_19 = arith.constant 0 : index
    %31 = memref.load %arg8[%c0_18, %c0_19] : memref<1x1xf32, #tpu.memory_space<smem>>
    %32 = vector.shape_cast %30 : vector<8x16xf32> to vector<1x8x16xf32>
    %cst_20 = arith.constant dense<0.000000e+00> : vector<1xf32>
    %33 = vector.multi_reduction <add>, %32, %cst_20 [1, 2] : vector<1x8x16xf32> to vector<1xf32>
    %34 = vector.shape_cast %33 : vector<1xf32> to vector<1x1x1xf32>
    %35 = vector.extract %34[0, 0, 0] : f32 from vector<1x1x1xf32>
    %36 = arith.addf %31, %35 : f32
    %c0_21 = arith.constant 0 : index
    %c0_22 = arith.constant 0 : index
    %37 = memref.load %arg8[%c0_21, %c0_22] : memref<1x1xf32, #tpu.memory_space<smem>>
    memref.store %36, %arg8[%c0_21, %c0_22] : memref<1x1xf32, #tpu.memory_space<smem>>
    %c1_i32 = arith.constant 1 : i32
    %38 = arith.cmpi eq, %arg0, %c1_i32 : i32
    %39 = arith.extui %38 : i1 to i32
    %c0_i32_23 = arith.constant 0 : i32
    %40 = arith.cmpi ne, %39, %c0_i32_23 : i32
    scf.if %40 {
      %c0_24 = arith.constant 0 : index
      %c0_25 = arith.constant 0 : index
      %41 = memref.load %arg8[%c0_24, %c0_25] : memref<1x1xf32, #tpu.memory_space<smem>>
      %cst_26 = arith.constant 1.562500e-02 : f32
      %42 = arith.mulf %41, %cst_26 : f32
      %cst_27 = arith.constant 0.000000e+00 : f32
      %43 = arith.maximumf %42, %cst_27 : f32
      %c0_28 = arith.constant 0 : index
      %c0_29 = arith.constant 0 : index
      %44 = memref.load %arg8[%c0_28, %c0_29] : memref<1x1xf32, #tpu.memory_space<smem>>
      memref.store %43, %arg8[%c0_28, %c0_29] : memref<1x1xf32, #tpu.memory_space<smem>>
    } else {
    }
    return
  }
  func.func @transform_0(%arg0: i32) -> (i32, i32) {
    %c0_i32 = arith.constant 0 : i32
    %c0_i32_0 = arith.constant 0 : i32
    return %arg0, %c0_i32 : i32, i32
  }
  func.func @transform_1(%arg0: i32) -> (i32, i32) {
    %c0_i32 = arith.constant 0 : i32
    %c0_i32_0 = arith.constant 0 : i32
    return %arg0, %c0_i32 : i32, i32
  }
  func.func @transform_2(%arg0: i32) -> (i32, i32) {
    %c0_i32 = arith.constant 0 : i32
    %c0_i32_0 = arith.constant 0 : i32
    return %arg0, %c0_i32 : i32, i32
  }
  func.func @transform_3(%arg0: i32) -> (i32, i32) {
    %c0_i32 = arith.constant 0 : i32
    %c0_i32_0 = arith.constant 0 : i32
    %c0_i32_1 = arith.constant 0 : i32
    return %c0_i32, %c0_i32_0 : i32, i32
  }
  func.func @transform_4(%arg0: i32) -> (i32, i32) {
    %c0_i32 = arith.constant 0 : i32
    %c0_i32_0 = arith.constant 0 : i32
    %c0_i32_1 = arith.constant 0 : i32
    return %c0_i32, %c0_i32_0 : i32, i32
  }
  func.func @transform_5(%arg0: i32) -> (i32, i32) {
    %c0_i32 = arith.constant 0 : i32
    %c0_i32_0 = arith.constant 0 : i32
    %c0_i32_1 = arith.constant 0 : i32
    return %c0_i32, %c0_i32_0 : i32, i32
  }
  func.func @transform_6(%arg0: i32) -> (i32, i32) {
    %c0_i32 = arith.constant 0 : i32
    %c0_i32_0 = arith.constant 0 : i32
    %c0_i32_1 = arith.constant 0 : i32
    return %c0_i32, %c0_i32_0 : i32, i32
  }
  func.func @transform_7(%arg0: i32) -> (i32, i32) {
    %c0_i32 = arith.constant 0 : i32
    %c0_i32_0 = arith.constant 0 : i32
    %c0_i32_1 = arith.constant 0 : i32
    return %c0_i32, %c0_i32_0 : i32, i32
  }
}

</mosaic_0001>

<llo_original>
// kernel: tpu_custom_call.1
$region0: #{tpu_custom_call.1}
  #allocation0 [shape = 'u32[]', space=smem, size = 0x4, offset = 0x4, fixed_abs, tag = 'smem constant byte address 0x4 - core index']
  #allocation1 [shape = 'u32[144,128]{1,0:T(1,128)}', space=vmem, size = 0x12000, scoped, tag = 'internal scratch']
  %s0 = inlined_call_operand.hbm [shape: f32[16,32], index: 0, kind: input, shape index: {}]
  %s1 = inlined_call_operand.hbm [shape: f32[16,16], index: 1, kind: input, shape index: {}]
  %s2 = inlined_call_operand.hbm [shape: f32[16,16], index: 2, kind: input, shape index: {}]
  %s3 = inlined_call_operand.hbm [shape: f32[32,32], index: 3, kind: input, shape index: {}]
  %s4 = inlined_call_operand.vmem [shape: f32[1,32], index: 4, kind: input, shape index: {}]
  %s5 = inlined_call_operand.hbm [shape: f32[32,32], index: 5, kind: input, shape index: {}]
  %s6 = inlined_call_operand.vmem [shape: f32[1,32], index: 6, kind: input, shape index: {}]
  %s7 = inlined_call_operand.hbm [shape: f32[1,1], index: 7, kind: output, shape index: {}]
  %s8 = sld [smem:[#allocation0]]
  $region89: #{tpu_custom_call.1} parent=0
    _
  %s10 = ssub.s32 1, %s8
  %s11 = scalar_select 0, %s10, %s8
  $region1: #{tpu_custom_call.1} parent=0
    #allocation2 [shape = 'u8[8192]{0}', space=vmem, size = 0x2000, scoped, tag = 'input window, operand 0']
    #allocation3 [shape = 's32[2]{0}', space=sflag, size = 0x8, scoped, tag = 'scoped memory for tpu_custom_call.1']
    #allocation4 [shape = 's32[2]{0}', space=sflag, size = 0x8, scoped, tag = 'scoped memory for tpu_custom_call.1']
    #allocation5 [shape = 'u8[8192]{0}', space=vmem, size = 0x2000, scoped, tag = 'input window, operand 1']
    #allocation6 [shape = 's32[2]{0}', space=sflag, size = 0x8, scoped, tag = 'scoped memory for tpu_custom_call.1']
    #allocation7 [shape = 'u8[8192]{0}', space=vmem, size = 0x2000, scoped, tag = 'input window, operand 2']
    #allocation8 [shape = 'u8[16384]{0}', space=vmem, size = 0x4000, scoped, tag = 'input window, operand 3, single buffered']
    #allocation9 [shape = 's32[1]{0}', space=sflag, size = 0x4, scoped, tag = 'scoped memory for tpu_custom_call.1']
    #allocation10 [shape = 'u8[16384]{0}', space=vmem, size = 0x4000, scoped, tag = 'input window, operand 5, single buffered']
    #allocation11 [shape = 'u8[512]{0}', space=smem, size = 0x200, scoped, tag = 'output window, operand 0, single buffered']
    %12 = vsyncpa [#allocation3], 0
    %s13 = scalar_lea.sflag [#allocation3], 1
    %14 = vsyncpa %s13, 0
    %15 = vsyncpa [#allocation6], 0
    %s16 = scalar_lea.sflag [#allocation6], 1
    %17 = vsyncpa %s16, 0
    %18 = vsyncpa [#allocation9], 0
    %19 = vsyncpa [#allocation4], 0
    loop: start=0, step=1, limit=4
    $region2: #{tpu_custom_call.1} parent=1 // loop_pre_header
      _
    $region3: #{tpu_custom_call.1} parent=1 // loop_header
      %s21 = sphi 0, %s25
      %p22 = scmp.ge.s32.totalorder %s21, 4
      %s31 = sphi 0, %s33
      %s34 = sphi 0, %s31
      %s35 = sphi 0, %s34
      %s51 = sphi 0, %s35
      %s57 = sphi 0, %s59
      %s60 = sphi 0, %s57
      %s61 = sphi 0, %s60
      %s77 = sphi 0, %s61
      %s83 = sphi 0, %s85
      %s86 = sphi 0, %s83
      %s87 = sphi 0, %s86
      %s103 = sphi 0, %s87
      %s107 = sphi 0, %s107
      %s109 = sphi 0, %s107
      %s110 = sphi 0, %s109
      %s124 = sphi 0, %s110
      %s128 = sphi 0, %s128
      %s130 = sphi 0, %s128
      %s131 = sphi 0, %s130
      %s145 = sphi 0, %s131
      %s149 = sphi 0, %s149
      %s151 = sphi 0, %s149
      %s152 = sphi 0, %s151
      %s166 = sphi 0, %s152
      %s170 = sphi 0, %s170
      %s172 = sphi 0, %s170
      %s173 = sphi 0, %s172
      %s187 = sphi 0, %s173
      %s191 = sphi 0, %s191
      %s193 = sphi 0, %s191
      %s194 = sphi 0, %s193
      %s208 = sphi 0, %s194
    $region4: #{tpu_custom_call.1} parent=1 // loop_header_branch
      %24 = sbr.rel (%p22) target = $region8
    $region5: #{tpu_custom_call.1} parent=1 // loop_body
      %s26 = ssub.s32 %s21, 1
      %s27 = ssub.s32 %s21, 2
      %s28 = sadd.s32 %s21, 1
      %s29 = ssub.s32 %s21, %s28
      %p30 = scmp.eq.s32.totalorder %s29, 0
      %s32 = sadd.s32 %s31, 1
      %s33 = scalar_select %p30, %s31, %s32
      %p36 = pneg %p30
      %p37 = scmp.eq.s32.totalorder %s21, 1
      %p38 = por %p36, %p37
      %p39 = scmp.ne.s32.totalorder %s31, %s34
      %p40 = scmp.eq.s32.totalorder %s21, 0
      %p41 = por %p39, %p40
      %p42 = scmp.ne.s32.totalorder %s31, %s34
      %p43 = scmp.eq.s32.totalorder %s26, 1
      %p44 = por %p42, %p43
      %p45 = scmp.ne.s32.totalorder %s34, %s35
      %p46 = scmp.eq.s32.totalorder %s26, 0
      %p47 = por %p45, %p46
      %p48 = scmp.ne.s32.totalorder %s34, %s35
      %p49 = scmp.eq.s32.totalorder %s27, 1
      %p50 = por %p48, %p49
      %p52 = scmp.ne.s32.totalorder %s35, %s51
      %p53 = scmp.eq.s32.totalorder %s27, 0
      %p54 = por %p52, %p53
      %s55 = ssub.s32 %s21, %s28
      %p56 = scmp.eq.s32.totalorder %s55, 0
      %s58 = sadd.s32 %s57, 1
      %s59 = scalar_select %p56, %s57, %s58
      %p62 = pneg %p56
      %p63 = scmp.eq.s32.totalorder %s21, 1
      %p64 = por %p62, %p63
      %p65 = scmp.ne.s32.totalorder %s57, %s60
      %p66 = scmp.eq.s32.totalorder %s21, 0
      %p67 = por %p65, %p66
      %p68 = scmp.ne.s32.totalorder %s57, %s60
      %p69 = scmp.eq.s32.totalorder %s26, 1
      %p70 = por %p68, %p69
      %p71 = scmp.ne.s32.totalorder %s60, %s61
      %p72 = scmp.eq.s32.totalorder %s26, 0
      %p73 = por %p71, %p72
      %p74 = scmp.ne.s32.totalorder %s60, %s61
      %p75 = scmp.eq.s32.totalorder %s27, 1
      %p76 = por %p74, %p75
      %p78 = scmp.ne.s32.totalorder %s61, %s77
      %p79 = scmp.eq.s32.totalorder %s27, 0
      %p80 = por %p78, %p79
      %s81 = ssub.s32 %s21, %s28
      %p82 = scmp.eq.s32.totalorder %s81, 0
      %s84 = sadd.s32 %s83, 1
      %s85 = scalar_select %p82, %s83, %s84
      %p88 = pneg %p82
      %p89 = scmp.eq.s32.totalorder %s21, 1
      %p90 = por %p88, %p89
      %p91 = scmp.ne.s32.totalorder %s83, %s86
      %p92 = scmp.eq.s32.totalorder %s21, 0
      %p93 = por %p91, %p92
      %p94 = scmp.ne.s32.totalorder %s83, %s86
      %p95 = scmp.eq.s32.totalorder %s26, 1
      %p96 = por %p94, %p95
      %p97 = scmp.ne.s32.totalorder %s86, %s87
      %p98 = scmp.eq.s32.totalorder %s26, 0
      %p99 = por %p97, %p98
      %p100 = scmp.ne.s32.totalorder %s86, %s87
      %p101 = scmp.eq.s32.totalorder %s27, 1
      %p102 = por %p100, %p101
      %p104 = scmp.ne.s32.totalorder %s87, %s103
      %p105 = scmp.eq.s32.totalorder %s27, 0
      %p106 = por %p104, %p105
      %s108 = sadd.s32 %s107, 1
      %p111 = scmp.eq.s32.totalorder %s21, 1
      %p112 = scmp.ne.s32.totalorder %s107, %s109
      %p113 = scmp.eq.s32.totalorder %s21, 0
      %p114 = por %p112, %p113
      %p115 = scmp.ne.s32.totalorder %s107, %s109
      %p116 = scmp.eq.s32.totalorder %s26, 1
      %p117 = por %p115, %p116
      %p118 = scmp.ne.s32.totalorder %s109, %s110
      %p119 = scmp.eq.s32.totalorder %s26, 0
      %p120 = por %p118, %p119
      %p121 = scmp.ne.s32.totalorder %s109, %s110
      %p122 = scmp.eq.s32.totalorder %s27, 1
      %p123 = por %p121, %p122
      %p125 = scmp.ne.s32.totalorder %s110, %s124
      %p126 = scmp.eq.s32.totalorder %s27, 0
      %p127 = por %p125, %p126
      %s129 = sadd.s32 %s128, 1
      %p132 = scmp.eq.s32.totalorder %s21, 1
      %p133 = scmp.ne.s32.totalorder %s128, %s130
      %p134 = scmp.eq.s32.totalorder %s21, 0
      %p135 = por %p133, %p134
      %p136 = scmp.ne.s32.totalorder %s128, %s130
      %p137 = scmp.eq.s32.totalorder %s26, 1
      %p138 = por %p136, %p137
      %p139 = scmp.ne.s32.totalorder %s130, %s131
      %p140 = scmp.eq.s32.totalorder %s26, 0
      %p141 = por %p139, %p140
      %p142 = scmp.ne.s32.totalorder %s130, %s131
      %p143 = scmp.eq.s32.totalorder %s27, 1
      %p144 = por %p142, %p143
      %p146 = scmp.ne.s32.totalorder %s131, %s145
      %p147 = scmp.eq.s32.totalorder %s27, 0
      %p148 = por %p146, %p147
      %s150 = sadd.s32 %s149, 1
      %p153 = scmp.eq.s32.totalorder %s21, 1
      %p154 = scmp.ne.s32.totalorder %s149, %s151
      %p155 = scmp.eq.s32.totalorder %s21, 0
      %p156 = por %p154, %p155
      %p157 = scmp.ne.s32.totalorder %s149, %s151
      %p158 = scmp.eq.s32.totalorder %s26, 1
      %p159 = por %p157, %p158
      %p160 = scmp.ne.s32.totalorder %s151, %s152
      %p161 = scmp.eq.s32.totalorder %s26, 0
      %p162 = por %p160, %p161
      %p163 = scmp.ne.s32.totalorder %s151, %s152
      %p164 = scmp.eq.s32.totalorder %s27, 1
      %p165 = por %p163, %p164
      %p167 = scmp.ne.s32.totalorder %s152, %s166
      %p168 = scmp.eq.s32.totalorder %s27, 0
      %p169 = por %p167, %p168
      %s171 = sadd.s32 %s170, 1
      %p174 = scmp.eq.s32.totalorder %s21, 1
      %p175 = scmp.ne.s32.totalorder %s170, %s172
      %p176 = scmp.eq.s32.totalorder %s21, 0
      %p177 = por %p175, %p176
      %p178 = scmp.ne.s32.totalorder %s170, %s172
      %p179 = scmp.eq.s32.totalorder %s26, 1
      %p180 = por %p178, %p179
      %p181 = scmp.ne.s32.totalorder %s172, %s173
      %p182 = scmp.eq.s32.totalorder %s26, 0
      %p183 = por %p181, %p182
      %p184 = scmp.ne.s32.totalorder %s172, %s173
      %p185 = scmp.eq.s32.totalorder %s27, 1
      %p186 = por %p184, %p185
      %p188 = scmp.ne.s32.totalorder %s173, %s187
      %p189 = scmp.eq.s32.totalorder %s27, 0
      %p190 = por %p188, %p189
      %s192 = sadd.s32 %s191, 1
      %p195 = scmp.eq.s32.totalorder %s21, 1
      %p196 = scmp.ne.s32.totalorder %s191, %s193
      %p197 = scmp.eq.s32.totalorder %s21, 0
      %p198 = por %p196, %p197
      %p199 = scmp.ne.s32.totalorder %s191, %s193
      %p200 = scmp.eq.s32.totalorder %s26, 1
      %p201 = por %p199, %p200
      %p202 = scmp.ne.s32.totalorder %s193, %s194
      %p203 = scmp.eq.s32.totalorder %s26, 0
      %p204 = por %p202, %p203
      %p205 = scmp.ne.s32.totalorder %s193, %s194
      %p206 = scmp.eq.s32.totalorder %s27, 1
      %p207 = por %p205, %p206
      %p209 = scmp.ne.s32.totalorder %s194, %s208
      %p210 = scmp.eq.s32.totalorder %s27, 0
      %p211 = por %p209, %p210
      %p212 = scmp.le.s32.totalorder 1, %s21
      %p213 = scmp.lt.s32.totalorder %s21, 3
      %p214 = pnand %p212, %p213
      %p215 = pneg %p214
      // Predicated region
      $region9: #{tpu_custom_call.1} parent=5 // pred_check
        _
      $region10: #{tpu_custom_call.1} parent=5 // pred_check_branch
        %217 = sbr.rel (%p214) target = $region12
      $region11: #{tpu_custom_call.1} parent=5 // pred_region
        %s218 = ssub.s32 %s21, 1
        // Predicated region
        $region13: #{tpu_custom_call.1} parent=11 // pred_check
          %p219 = pneg %p120
        $region14: #{tpu_custom_call.1} parent=11 // pred_check_branch
          %221 = sbr.rel (%p219) target = $region16
        $region15: #{tpu_custom_call.1} parent=11 // pred_region
          %s223 = ssub.s32 512, 512
          %224 = vsyncadd [#allocation9], %s223
          %s225 = sshll.u32 [#allocation8], 4
          %s226 = int_to_ptr.vmem [resolvable:$true] %s225
          %231 = dma.hbm_to_vmem [thread:$0]  %s3, 512, %s226, [#allocation9], 128, 128, 8
        $region16: #{tpu_custom_call.1} parent=11 // pred_fallthru
          _
        // Predicated region
        $region17: #{tpu_custom_call.1} parent=11 // pred_check
          %p232 = pneg %p141
        $region18: #{tpu_custom_call.1} parent=11 // pred_check_branch
          %234 = sbr.rel (%p232) target = $region20
        $region19: #{tpu_custom_call.1} parent=11 // pred_region
          _
        $region20: #{tpu_custom_call.1} parent=11 // pred_fallthru
          _
        // Predicated region
        $region21: #{tpu_custom_call.1} parent=11 // pred_check
          %p235 = pneg %p162
        $region22: #{tpu_custom_call.1} parent=11 // pred_check_branch
          %237 = sbr.rel (%p235) target = $region24
        $region23: #{tpu_custom_call.1} parent=11 // pred_region
          %s239 = ssub.s32 512, 512
          %240 = vsyncadd [#allocation9], %s239
          %s241 = sshll.u32 [#allocation10], 4
          %s242 = int_to_ptr.vmem [resolvable:$true] %s241
          %247 = dma.hbm_to_vmem [thread:$0]  %s5, 512, %s242, [#allocation9], 128, 128, 8
        $region24: #{tpu_custom_call.1} parent=11 // pred_fallthru
          _
        // Predicated region
        $region25: #{tpu_custom_call.1} parent=11 // pred_check
          %p248 = pneg %p183
        $region26: #{tpu_custom_call.1} parent=11 // pred_check_branch
          %250 = sbr.rel (%p248) target = $region28
        $region27: #{tpu_custom_call.1} parent=11 // pred_region
          _
        $region28: #{tpu_custom_call.1} parent=11 // pred_fallthru
          _
      $region12: #{tpu_custom_call.1} parent=5 // pred_fallthru
        _
      %p251 = scmp.lt.s32.totalorder %s21, 2
      // Predicated region
      $region29: #{tpu_custom_call.1} parent=5 // pred_check
        %p252 = pneg %p251
      $region30: #{tpu_custom_call.1} parent=5 // pred_check_branch
        %254 = sbr.rel (%p252) target = $region32
      $region31: #{tpu_custom_call.1} parent=5 // pred_region
        // Predicated region
        $region33: #{tpu_custom_call.1} parent=31 // pred_check
          %p255 = pneg %p41
        $region34: #{tpu_custom_call.1} parent=31 // pred_check_branch
          %257 = sbr.rel (%p255) target = $region36
        $region35: #{tpu_custom_call.1} parent=31 // pred_region
          %s258 = sand.u32 %s31, 1
          %s259 = scalar_lea.sflag [#allocation3], %s258
          %s260 = sand.u32 %s31, 1
          %s261 = smul.addr %s260, 8
          %s262 = scalar_lea.vmem [#allocation2], %s261
          %s264 = ssub.s32 128, 128
          %265 = vsyncadd %s259, %s264
          %s266 = smul.addr %s21, 128
          %s267 = scalar_lea.hbm %s0, %s266
          %s269 = sshll.u32 %s262, 4
          %s270 = int_to_ptr.vmem [resolvable:$true] %s269
          %272 = dma.hbm_to_vmem [thread:$0]  %s267, 128, %s270, %s259
        $region36: #{tpu_custom_call.1} parent=31 // pred_fallthru
          _
        // Predicated region
        $region37: #{tpu_custom_call.1} parent=31 // pred_check
          %p273 = pneg %p67
        $region38: #{tpu_custom_call.1} parent=31 // pred_check_branch
          %275 = sbr.rel (%p273) target = $region40
        $region39: #{tpu_custom_call.1} parent=31 // pred_region
          %s276 = sand.u32 %s21, 1
          %s277 = scalar_lea.sflag [#allocation6], %s276
          %s278 = sand.u32 %s57, 1
          %s279 = smul.addr %s278, 8
          %s280 = scalar_lea.vmem [#allocation5], %s279
          %s282 = ssub.s32 128, 128
          %283 = vsyncadd %s277, %s282
          %s284 = smul.addr %s21, 128
          %s285 = scalar_lea.hbm %s1, %s284
          %s287 = sshll.u32 %s280, 4
          %s288 = int_to_ptr.vmem [resolvable:$true] %s287
          %290 = dma.hbm_to_vmem [thread:$0]  %s285, 128, %s288, %s277
        $region40: #{tpu_custom_call.1} parent=31 // pred_fallthru
          _
        // Predicated region
        $region41: #{tpu_custom_call.1} parent=31 // pred_check
          %p291 = pneg %p93
        $region42: #{tpu_custom_call.1} parent=31 // pred_check_branch
          %293 = sbr.rel (%p291) target = $region44
        $region43: #{tpu_custom_call.1} parent=31 // pred_region
          %s294 = sand.u32 %s21, 1
          %s295 = scalar_lea.sflag [#allocation6], %s294
          %s296 = sand.u32 %s83, 1
          %s297 = smul.addr %s296, 8
          %s298 = scalar_lea.vmem [#allocation7], %s297
          %s300 = ssub.s32 128, 128
          %301 = vsyncadd %s295, %s300
          %s302 = smul.addr %s21, 128
          %s303 = scalar_lea.hbm %s2, %s302
          %s305 = sshll.u32 %s298, 4
          %s306 = int_to_ptr.vmem [resolvable:$true] %s305
          %308 = dma.hbm_to_vmem [thread:$0]  %s303, 128, %s306, %s295
        $region44: #{tpu_custom_call.1} parent=31 // pred_fallthru
          _
      $region32: #{tpu_custom_call.1} parent=5 // pred_fallthru
        _
      %p309 = scmp.le.s32.totalorder 1, %s21
      %p310 = scmp.lt.s32.totalorder %s21, 3
      %p311 = pnand %p309, %p310
      %p312 = pneg %p311
      // Predicated region
      $region45: #{tpu_custom_call.1} parent=5 // pred_check
        _
      $region46: #{tpu_custom_call.1} parent=5 // pred_check_branch
        %314 = sbr.rel (%p311) target = $region48
      $region47: #{tpu_custom_call.1} parent=5 // pred_region
        %s315 = ssub.s32 %s21, 1
        %s316 = sand.u32 %s34, 1
        %s317 = scalar_lea.sflag [#allocation3], %s316
        %s318 = sand.u32 %s34, 1
        %s319 = smul.addr %s318, 8
        %s320 = scalar_lea.vmem [#allocation2], %s319
        // Predicated region
        $region49: #{tpu_custom_call.1} parent=47 // pred_check
          %p321 = pneg %p47
        $region50: #{tpu_custom_call.1} parent=47 // pred_check_branch
          %323 = sbr.rel (%p321) target = $region52
        $region51: #{tpu_custom_call.1} parent=47 // pred_region
          %324 = dma.done %s317, 128
        $region52: #{tpu_custom_call.1} parent=47 // pred_fallthru
          _
        %s325 = sand.u32 %s26, 1
        %s326 = scalar_lea.sflag [#allocation6], %s325
        %s327 = sand.u32 %s60, 1
        %s328 = smul.addr %s327, 8
        %s329 = scalar_lea.vmem [#allocation5], %s328
        // Predicated region
        $region53: #{tpu_custom_call.1} parent=47 // pred_check
          %p330 = pneg %p73
        $region54: #{tpu_custom_call.1} parent=47 // pred_check_branch
          %332 = sbr.rel (%p330) target = $region56
        $region55: #{tpu_custom_call.1} parent=47 // pred_region
          %333 = dma.done %s326, 128
        $region56: #{tpu_custom_call.1} parent=47 // pred_fallthru
          _
        %s334 = sand.u32 %s26, 1
        %s335 = scalar_lea.sflag [#allocation6], %s334
        %s336 = sand.u32 %s86, 1
        %s337 = smul.addr %s336, 8
        %s338 = scalar_lea.vmem [#allocation7], %s337
        // Predicated region
        $region57: #{tpu_custom_call.1} parent=47 // pred_check
          %p339 = pneg %p99
        $region58: #{tpu_custom_call.1} parent=47 // pred_check_branch
          %341 = sbr.rel (%p339) target = $region60
        $region59: #{tpu_custom_call.1} parent=47 // pred_region
          %342 = dma.done %s335, 128
        $region60: #{tpu_custom_call.1} parent=47 // pred_fallthru
          _
        // Predicated region
        $region61: #{tpu_custom_call.1} parent=47 // pred_check
          %p343 = pneg %p120
        $region62: #{tpu_custom_call.1} parent=47 // pred_check_branch
          %345 = sbr.rel (%p343) target = $region64
        $region63: #{tpu_custom_call.1} parent=47 // pred_region
          %346 = dma.done [#allocation9], 512
        $region64: #{tpu_custom_call.1} parent=47 // pred_fallthru
          _
        // Predicated region
        $region65: #{tpu_custom_call.1} parent=47 // pred_check
          %p347 = pneg %p162
        $region66: #{tpu_custom_call.1} parent=47 // pred_check_branch
          %349 = sbr.rel (%p347) target = $region68
        $region67: #{tpu_custom_call.1} parent=47 // pred_region
          %350 = dma.done [#allocation9], 512
        $region68: #{tpu_custom_call.1} parent=47 // pred_fallthru
          _
        %s351 = sand.u32 %s34, 1
        %s352 = scalar_lea.sflag [#allocation3], %s351
        %s353 = sand.u32 %s34, 1
        %s354 = smul.addr %s353, 8
        %s355 = scalar_lea.vmem [#allocation2], %s354
        %p356 = pneg %p47
        %p357 = pneg %p44
        %s358 = sand.u32 %s26, 1
        %s359 = scalar_lea.sflag [#allocation6], %s358
        %s360 = sand.u32 %s60, 1
        %s361 = smul.addr %s360, 8
        %s362 = scalar_lea.vmem [#allocation5], %s361
        %p363 = pneg %p73
        %p364 = pneg %p70
        %s365 = sand.u32 %s26, 1
        %s366 = scalar_lea.sflag [#allocation6], %s365
        %s367 = sand.u32 %s86, 1
        %s368 = smul.addr %s367, 8
        %s369 = scalar_lea.vmem [#allocation7], %s368
        %p370 = pneg %p99
        %p371 = pneg %p96
        %p372 = pneg %p120
        %p373 = pneg %p117
        %p374 = pneg %p141
        %p375 = pneg %p138
        %p376 = pneg %p162
        %p377 = pneg %p159
        %p378 = pneg %p183
        %p379 = pneg %p180
        %p380 = pneg %p204
        %p381 = pneg %p201
        %p382 = scmp.eq.s32.totalorder %s26, 0
        // Predicated region
        $region69: #{tpu_custom_call.1} parent=47 // pred_check
          %p383 = pneg %p382
        $region70: #{tpu_custom_call.1} parent=47 // pred_check_branch
          %385 = sbr.rel (%p383) target = $region72
        $region71: #{tpu_custom_call.1} parent=47 // pred_region
          %s386 = scalar_lea.smem [#allocation11], 0
          %387 = sst [smem:[%s386]] 0.0
        $region72: #{tpu_custom_call.1} parent=47 // pred_fallthru
          _
        %v388 = vld [vmem:[%s320] sm:$0xff]
        %v389 = vld [vmem:[%s329] sm:$0xff]
        %v390 = vld [vmem:[%s338] sm:$0xff]
        %v391 = vld [vmem:[#allocation8] sm:$0xff]
        %v392 = vld [vmem:[#allocation8 + $0x8] sm:$0xff]
        %v393 = vld [vmem:[#allocation8 + $0x10] sm:$0xff]
        %v394 = vld [vmem:[#allocation8 + $0x18] sm:$0xff]
        %v395 = vld [vmem:[%s4] sm:$0x1]
        %v397 = vlaneseq
        %v398 = vshrl.u32 %v397, 7
        %v399 = vsub.s32 0, %v398
        %v400 = vrot.slane %v395, %v399
        %vm402 = vcmask 261120
        %v404 = vsel %vm402, %v388, 0
        %406 = vmatprep.subr.mxu0 0.0
        %407 = vmatpush1.msra.mxu0 %v391
        %408 = vmatprep.subr.mxu0 0.0
        %409 = vmatpush1.msra.mxu0 %v392
        %410 = vmatprep.subr.mxu0 0.0
        %411 = vmatpush1.msra.mxu0 %v393
        %412 = vmatprep.subr.mxu0 0.0
        %413 = vmatpush1.msra.mxu0 %v394
        %414 = vmatprep.subr.mxu0 0.0
        %415 = vmatpush1.msra.mxu0 0.0
        %416 = vmatprep.subr.mxu0 0.0
        %417 = vmatpush1.msra.mxu0 0.0
        %418 = vmatprep.subr.mxu0 0.0
        %419 = vmatpush1.msra.mxu0 0.0
        %420 = vmatprep.subr.mxu0 0.0
        %421 = vmatpush1.msra.mxu0 0.0
        %422 = vmatprep.subr.mxu0 0.0
        %423 = vmatpush1.msra.mxu0 0.0
        %424 = vmatprep.subr.mxu0 0.0
        %425 = vmatpush1.msra.mxu0 0.0
        %426 = vmatprep.subr.mxu0 0.0
        %427 = vmatpush1.msra.mxu0 0.0
        %428 = vmatprep.subr.mxu0 0.0
        %429 = vmatpush1.msra.mxu0 0.0
        %430 = vmatprep.subr.mxu0 0.0
        %431 = vmatpush1.msra.mxu0 0.0
        %432 = vmatprep.subr.mxu0 0.0
        %433 = vmatpush1.msra.mxu0 0.0
        %434 = vmatprep.subr.mxu0 0.0
        %435 = vmatpush1.msra.mxu0 0.0
        %436 = vmatprep.subr.mxu0 0.0
        %437 = vmatpush1.msra.mxu0 0.0
        %438 = vmatprep.subr.mxu0 0.0
        %439 = vmatpush1.msra.mxu0 0.0
        %440 = vmatprep.subr.mxu0 0.0
        %441 = vmatpush1.msra.mxu0 0.0
        %442 = vmatprep.subr.mxu0 0.0
        %443 = vmatpush1.msra.mxu0 0.0
        %444 = vmatprep.subr.mxu0 0.0
        %445 = vmatpush1.msra.mxu0 0.0
        %446 = vmatprep.subr.mxu0 0.0
        %447 = vmatpush1.msra.mxu0 0.0
        %448 = vmatprep.subr.mxu0 0.0
        %449 = vmatpush1.msra.mxu0 0.0
        %450 = vmatprep.subr.mxu0 0.0
        %451 = vmatpush1.msra.mxu0 0.0
        %452 = vmatprep.subr.mxu0 0.0
        %453 = vmatpush1.msra.mxu0 0.0
        %454 = vmatprep.subr.mxu0 0.0
        %455 = vmatpush1.msra.mxu0 0.0
        %456 = vmatprep.subr.mxu0 0.0
        %457 = vmatpush1.msra.mxu0 0.0
        %458 = vmatprep.subr.mxu0 0.0
        %459 = vmatpush1.msra.mxu0 0.0
        %460 = vmatprep.subr.mxu0 0.0
        %461 = vmatpush1.msra.mxu0 0.0
        %462 = vmatprep.subr.mxu0 0.0
        %463 = vmatpush1.msra.mxu0 0.0
        %464 = vmatprep.subr.mxu0 0.0
        %465 = vmatpush1.msra.mxu0 0.0
        %466 = vmatprep.subr.mxu0 0.0
        %467 = vmatpush1.msra.mxu0 0.0
        %468 = vmatprep.subr.mxu0 0.0
        %469 = vmatpush1.msra.mxu0 0.0
        %470 = vmatprep.mubr.f32.mxu0 0.0
        %471 = vmatmul.mubr.f32.gmra.mrb[0].mxu0 %v404
        %v472 = vpop.f32.mrb[0].mxu0
        %v473 = vadd.f32 %v400, %v472
        %v474 = vpop.f32.mrb[0].mxu0
        %475 = vdwg.mxu0
        %v476 = vmax.f32 %v473, 0.0
        %v477 = vld [vmem:[#allocation10] sm:$0xff]
        %v478 = vld [vmem:[#allocation10 + $0x8] sm:$0xff]
        %v479 = vld [vmem:[#allocation10 + $0x10] sm:$0xff]
        %v480 = vld [vmem:[#allocation10 + $0x18] sm:$0xff]
        %v481 = vld [vmem:[%s6] sm:$0x1]
        %v483 = vlaneseq
        %v484 = vshrl.u32 %v483, 7
        %v485 = vsub.s32 0, %v484
        %v486 = vrot.slane %v481, %v485
        %v489 = vsel %vm402, %v476, 0
        %491 = vmatprep.subr.mxu0 0.0
        %492 = vmatpush1.msra.mxu0 %v477
        %493 = vmatprep.subr.mxu0 0.0
        %494 = vmatpush1.msra.mxu0 %v478
        %495 = vmatprep.subr.mxu0 0.0
        %496 = vmatpush1.msra.mxu0 %v479
        %497 = vmatprep.subr.mxu0 0.0
        %498 = vmatpush1.msra.mxu0 %v480
        %499 = vmatprep.subr.mxu0 0.0
        %500 = vmatpush1.msra.mxu0 0.0
        %501 = vmatprep.subr.mxu0 0.0
        %502 = vmatpush1.msra.mxu0 0.0
        %503 = vmatprep.subr.mxu0 0.0
        %504 = vmatpush1.msra.mxu0 0.0
        %505 = vmatprep.subr.mxu0 0.0
        %506 = vmatpush1.msra.mxu0 0.0
        %507 = vmatprep.subr.mxu0 0.0
        %508 = vmatpush1.msra.mxu0 0.0
        %509 = vmatprep.subr.mxu0 0.0
        %510 = vmatpush1.msra.mxu0 0.0
        %511 = vmatprep.subr.mxu0 0.0
        %512 = vmatpush1.msra.mxu0 0.0
        %513 = vmatprep.subr.mxu0 0.0
        %514 = vmatpush1.msra.mxu0 0.0
        %515 = vmatprep.subr.mxu0 0.0
        %516 = vmatpush1.msra.mxu0 0.0
        %517 = vmatprep.subr.mxu0 0.0
        %518 = vmatpush1.msra.mxu0 0.0
        %519 = vmatprep.subr.mxu0 0.0
        %520 = vmatpush1.msra.mxu0 0.0
        %521 = vmatprep.subr.mxu0 0.0
        %522 = vmatpush1.msra.mxu0 0.0
        %523 = vmatprep.subr.mxu0 0.0
        %524 = vmatpush1.msra.mxu0 0.0
        %525 = vmatprep.subr.mxu0 0.0
        %526 = vmatpush1.msra.mxu0 0.0
        %527 = vmatprep.subr.mxu0 0.0
        %528 = vmatpush1.msra.mxu0 0.0
        %529 = vmatprep.subr.mxu0 0.0
        %530 = vmatpush1.msra.mxu0 0.0
        %531 = vmatprep.subr.mxu0 0.0
        %532 = vmatpush1.msra.mxu0 0.0
        %533 = vmatprep.subr.mxu0 0.0
        %534 = vmatpush1.msra.mxu0 0.0
        %535 = vmatprep.subr.mxu0 0.0
        %536 = vmatpush1.msra.mxu0 0.0
        %537 = vmatprep.subr.mxu0 0.0
        %538 = vmatpush1.msra.mxu0 0.0
        %539 = vmatprep.subr.mxu0 0.0
        %540 = vmatpush1.msra.mxu0 0.0
        %541 = vmatprep.subr.mxu0 0.0
        %542 = vmatpush1.msra.mxu0 0.0
        %543 = vmatprep.subr.mxu0 0.0
        %544 = vmatpush1.msra.mxu0 0.0
        %545 = vmatprep.subr.mxu0 0.0
        %546 = vmatpush1.msra.mxu0 0.0
        %547 = vmatprep.subr.mxu0 0.0
        %548 = vmatpush1.msra.mxu0 0.0
        %549 = vmatprep.subr.mxu0 0.0
        %550 = vmatpush1.msra.mxu0 0.0
        %551 = vmatprep.subr.mxu0 0.0
        %552 = vmatpush1.msra.mxu0 0.0
        %553 = vmatprep.subr.mxu0 0.0
        %554 = vmatpush1.msra.mxu0 0.0
        %555 = vmatprep.mubr.f32.mxu0 0.0
        %556 = vmatmul.mubr.f32.gmra.mrb[0].mxu0 %v489
        %v557 = vpop.f32.mrb[0].mxu0
        %v558 = vadd.f32 %v486, %v557
        %v559 = vpop.f32.mrb[0].mxu0
        %560 = vdwg.mxu0
        %v561 = vtanh.pop %v558
        %v562 = vsub.f32 0.0, %v561
        %v563 = vmul.f32 %v562, 1.442695
        %v564 = vpow.pop %v563
        %v565 = vsub.f32 %v389, %v390
        %567 = vrot.lane.b32.xlu0 %v565, 16
        %v568 = vpop.permute.xlu0 %567
        %v570 = vmul.f32 %v564, %v568
        %v571 = vmul.f32 %v558, 2.0
        %v572 = vsub.f32 %v571, %v389
        %v573 = vsub.f32 %v572, %v390
        %575 = vrot.lane.b32.xlu0 %v573, 16
        %v576 = vpop.permute.xlu0 %575
        %v578 = vmul.f32 %v570, %v576
        %s579 = sld [smem:[#allocation11]]
        %581 = vrot.lane.b32.xlu0 %v578, 112
        %v582 = vpop.permute.xlu0 %581
        %vm584 = vcmask 130048
        %v585 = vsel %vm584, %v582, 0.0
        %586 = vadd.xlane.f32.xlu0 %v585
        %v587 = vpop.xlane.xlu0 %586
        %v588 = vrot.slane %v587, 4
        %v589 = vadd.f32 %v587, %v588
        %v590 = vrot.slane %v589, 2
        %v591 = vadd.f32 %v589, %v590
        %v592 = vrot.slane %v591, 1
        %v593 = vadd.f32 %v591, %v592
        %s594 = vtos %v593
        %s595 = sadd.f32 %s579, %s594
        %s596 = scalar_lea.smem [#allocation11], 0
        %597 = sst [smem:[%s596]] %s595
        %p598 = scmp.eq.s32.totalorder %s26, 1
        // Predicated region
        $region73: #{tpu_custom_call.1} parent=47 // pred_check
          %p599 = pneg %p598
        $region74: #{tpu_custom_call.1} parent=47 // pred_check_branch
          %601 = sbr.rel (%p599) target = $region76
        $region75: #{tpu_custom_call.1} parent=47 // pred_region
          %s602 = sld [smem:[#allocation11]]
          %s603 = smul.f32 %s602, 0.015625
          %s604 = smax.f32 %s603, 0.0
          %605 = sst [smem:[%s596]] %s604
        $region76: #{tpu_custom_call.1} parent=47 // pred_fallthru
          _
        // Predicated region
        $region77: #{tpu_custom_call.1} parent=47 // pred_check
          %p606 = pneg %p201
        $region78: #{tpu_custom_call.1} parent=47 // pred_check_branch
          %608 = sbr.rel (%p606) target = $region80
        $region79: #{tpu_custom_call.1} parent=47 // pred_region
          %s610 = ssub.s32 16, 16
          %611 = vsyncadd [#allocation4], %s610
          %614 = dma.smem_to_hbm [#allocation11], 16, %s7, [#allocation4]
        $region80: #{tpu_custom_call.1} parent=47 // pred_fallthru
          _
        // Predicated region
        $region81: #{tpu_custom_call.1} parent=47 // pred_check
          %p615 = pneg %p201
        $region82: #{tpu_custom_call.1} parent=47 // pred_check_branch
          %617 = sbr.rel (%p615) target = $region84
        $region83: #{tpu_custom_call.1} parent=47 // pred_region
          %618 = dma.done [#allocation4], 16
        $region84: #{tpu_custom_call.1} parent=47 // pred_fallthru
          _
        %619 = sfence
      $region48: #{tpu_custom_call.1} parent=5 // pred_fallthru
        _
      %p620 = scmp.le.s32.totalorder 2, %s21
      // Predicated region
      $region85: #{tpu_custom_call.1} parent=5 // pred_check
        %p621 = pneg %p620
      $region86: #{tpu_custom_call.1} parent=5 // pred_check_branch
        %623 = sbr.rel (%p621) target = $region88
      $region87: #{tpu_custom_call.1} parent=5 // pred_region
        %s624 = ssub.s32 %s21, 2
      $region88: #{tpu_custom_call.1} parent=5 // pred_fallthru
        _
    $region6: #{tpu_custom_call.1} parent=1 // loop_footer
      %s25 = sadd.s32 1, %s21
    $region7: #{tpu_custom_call.1} parent=1 // loop_footer_branch
      %20 = sbr.rel target = $region3
    $region8: #{tpu_custom_call.1} parent=1 // loop_exit
      _
    %625 = vsyncpa [#allocation3], 1
    %s626 = scalar_lea.sflag [#allocation3], 1
    %627 = vsyncpa %s626, 1
    %628 = vsyncpa [#allocation6], 1
    %s629 = scalar_lea.sflag [#allocation6], 1
    %630 = vsyncpa %s629, 1
    %631 = vsyncpa [#allocation9], 1
    %632 = vsyncpa [#allocation4], 1
    %s633 = scalar_lea.sflag [#allocation4], 1
    %634 = vsyncpa %s633, 1

</llo_original>
